<compile_context>
chip_gen: v7x
topology: tpu7x:2x2x1
jax: 0.10.0
libtpu: 0.0.40
codegen_flags: <defaults>
</compile_context>

<pallas_src>
import math

import jax
import jax.numpy as jnp
from jax.experimental import pallas as pl
from jax.experimental.pallas import tpu as pltpu


def _round_up(x, m):
    return (x + m - 1) // m * m


def critic_kernel(x_ref, w1_ref, b1_ref, w2_ref, b2_ref, w3_ref, b3_ref, o_ref):
    """One batch tile of the fused Critic MLP (eval mode).

    Per layer: Linear (+folded BatchNorm) -> ReLU; Dropout is identity.
    Matmul inputs are bf16, accumulation and elementwise math are f32.
    """
    x = x_ref[...]

    z1 = jnp.dot(x, w1_ref[...], preferred_element_type=jnp.float32) + b1_ref[...]
    h1 = jnp.maximum(z1, 0.0).astype(w2_ref.dtype)

    z2 = jnp.dot(h1, w2_ref[...], preferred_element_type=jnp.float32) + b2_ref[...]
    h2 = jnp.maximum(z2, 0.0).astype(w3_ref.dtype)

    o_ref[...] = jnp.dot(h2, w3_ref[...], preferred_element_type=jnp.float32) + b3_ref[...]


def prepare_critic_params(params, *, compute_dtype=jnp.bfloat16):
    """One-time parameter prep: fold eval-mode BatchNorm into weights/biases,
    zero-pad to TPU-friendly shapes, cast matmul weights to bf16.

    Padding is mathematically inert: padded weight rows/cols and bias lanes
    are zero, so padded lanes stay exactly zero through ReLU.
    """
    eps = 1e-5
    f32 = jnp.float32

    w1 = params["w1"].astype(f32)
    b1 = params["b1"].astype(f32)
    w2 = params["w2"].astype(f32)
    b2 = params["b2"].astype(f32)
    w3 = params["w3"].astype(f32)
    b3 = params["b3"].astype(f32)

    # Fold BN (eval): y = z*s + (beta - mean*s),  s = gamma/sqrt(var+eps)
    s1 = params["bn1_gamma"] / jnp.sqrt(params["bn1_var"] + eps)
    w1 = w1 * s1[None, :]
    b1 = (b1 - params["bn1_mean"]) * s1 + params["bn1_beta"]

    s2 = params["bn2_gamma"] / jnp.sqrt(params["bn2_var"] + eps)
    w2 = w2 * s2[None, :]
    b2 = (b2 - params["bn2_mean"]) * s2 + params["bn2_beta"]

    d_in, h1_dim = w1.shape
    h2_dim = w2.shape[1]

    D_p = _round_up(d_in, 128)    # lane-aligned layer-1 contraction dim
    H1_p = _round_up(h1_dim, 16)  # 400 -> 400 (already aligned)
    H2_p = _round_up(h2_dim, 16)  # 300 -> 304 (minimal pad, not 384/512)
    O_p = 8                       # real output is column 0; >=8 lanes for the store

    def pad2(a, r, c):
        return jnp.pad(a, ((0, r - a.shape[0]), (0, c - a.shape[1])))

    def pad_row(v, c):
        return jnp.pad(v, (0, c - v.shape[0]))[None, :]

    return dict(
        w1=pad2(w1, D_p, H1_p).astype(compute_dtype),
        b1=pad_row(b1, H1_p),
        w2=pad2(w2, H1_p, H2_p).astype(compute_dtype),
        b2=pad_row(b2, H2_p),
        w3=pad2(w3, H2_p, O_p).astype(compute_dtype),
        b3=pad_row(b3, O_p),
    )


def critic_forward(state, action, prepared):
    """state: (B, state_dim), action: (B, action_dim) -> (B, 1) float32."""
    B = state.shape[0]
    cdt = prepared["w1"].dtype

    D_p = prepared["w1"].shape[0]
    H1_p = prepared["w1"].shape[1]
    H2_p = prepared["w2"].shape[1]
    O_p = prepared["w3"].shape[1]

    # Only per-call prep: concat the two inputs, cast to bf16, pad batch+lanes.
    x = jnp.concatenate([state, action], axis=1).astype(cdt)
    d_in = x.shape[1]

    B8 = _round_up(max(B, 8), 8)
    tile_b = min(256, B8)               # modest tile: fits v7x 32 MiB scoped VMEM easily
    B_p = _round_up(B8, tile_b)

    x_p = jnp.pad(x, ((0, B_p - B), (0, D_p - d_in)))

    operands = (x_p, prepared["w1"], prepared["b1"], prepared["w2"],
                prepared["b2"], prepared["w3"], prepared["b3"])

    flops = 2 * B_p * (D_p * H1_p + H1_p * H2_p + H2_p * O_p)
    bytes_accessed = sum(math.prod(o.shape) * o.dtype.itemsize for o in operands)
    bytes_accessed += B_p * O_p * 4

    def const_spec(shape):
        # Weights/biases: same block every grid step -> stay VMEM-resident.
        return pl.BlockSpec(shape, lambda i: (0, 0))

    out_p = pl.pallas_call(
        critic_kernel,
        out_shape=jax.ShapeDtypeStruct((B_p, O_p), jnp.float32),
        grid=(B_p // tile_b,),
        in_specs=[
            pl.BlockSpec((tile_b, D_p), lambda i: (i, 0)),  # activations: batch-tiled
            const_spec((D_p, H1_p)),
            const_spec((1, H1_p)),
            const_spec((H1_p, H2_p)),
            const_spec((1, H2_p)),
            const_spec((H2_p, O_p)),
            const_spec((1, O_p)),
        ],
        out_specs=pl.BlockSpec((tile_b, O_p), lambda i: (i, 0)),
        compiler_params=pltpu.CompilerParams(
            dimension_semantics=("parallel",)),
        cost_estimate=pl.CostEstimate(
            flops=int(flops),
            transcendentals=0,
            bytes_accessed=int(bytes_accessed)),
    )(*operands)

    return out_p[:B, :1]


def init_critic_params(key, state_dim, action_dim):
    """Deterministic synthetic parameters matching the PyTorch module shapes."""
    d_in = state_dim + action_dim
    ks = jax.random.split(key, 12)

    def linear(kw, kb, fan_in, fan_out):
        bound = 1.0 / jnp.sqrt(fan_in)
        w = jax.random.uniform(kw, (fan_in, fan_out), jnp.float32, -bound, bound)
        b = jax.random.uniform(kb, (fan_out,), jnp.float32, -bound, bound)
        return w, b

    w1, b1 = linear(ks[0], ks[1], d_in, 400)
    w2, b2 = linear(ks[2], ks[3], 400, 300)
    w3, b3 = linear(ks[4], ks[5], 300, 1)

    return dict(
        w1=w1, b1=b1, w2=w2, b2=b2, w3=w3, b3=b3,
        bn1_gamma=1.0 + 0.1 * jax.random.normal(ks[6], (400,), jnp.float32),
        bn1_beta=0.1 * jax.random.normal(ks[7], (400,), jnp.float32),
        bn1_mean=0.05 * jax.random.normal(ks[8], (400,), jnp.float32),
        bn1_var=jax.random.uniform(ks[9], (400,), jnp.float32, 0.5, 1.5),
        bn2_gamma=1.0 + 0.1 * jax.random.normal(ks[10], (300,), jnp.float32),
        bn2_beta=0.1 * jax.random.normal(ks[11], (300,), jnp.float32),
        bn2_mean=jnp.zeros((300,), jnp.float32),
        bn2_var=jnp.ones((300,), jnp.float32),
    )


def critic_reference(state, action, params):
    """Pure-JAX f32 eval-mode reference (matches the PyTorch module)."""
    eps = 1e-5
    x = jnp.concatenate([state, action], axis=1).astype(jnp.float32)
    z1 = x @ params["w1"] + params["b1"]
    z1 = (z1 - params["bn1_mean"]) / jnp.sqrt(params["bn1_var"] + eps) \
        * params["bn1_gamma"] + params["bn1_beta"]
    h1 = jnp.maximum(z1, 0.0)
    z2 = h1 @ params["w2"] + params["b2"]
    z2 = (z2 - params["bn2_mean"]) / jnp.sqrt(params["bn2_var"] + eps) \
        * params["bn2_gamma"] + params["bn2_beta"]
    h2 = jnp.maximum(z2, 0.0)
    return h2 @ params["w3"] + params["b3"]


if __name__ == "__main__":
    key = jax.random.PRNGKey(0)
    k_params, k_state, k_action = jax.random.split(key, 3)

    batch, state_dim, action_dim = 2, 16, 8
    params = init_critic_params(k_params, state_dim, action_dim)
    prepared = prepare_critic_params(params)   # one-time prep (fold BN, pad, bf16)

    state = jax.random.normal(k_state, (batch, state_dim), jnp.float32)
    action = jax.random.normal(k_action, (batch, action_dim), jnp.float32)

    fwd = jax.jit(critic_forward)
    out = jax.block_until_ready(fwd(state, action, prepared))

    ref = critic_reference(state, action, params)
    assert out.shape == (batch, 1), out.shape
    # Tolerance accounts for bf16 matmul inputs (f32 accumulation), as
    # recommended in the perf review; observed error is ~1e-3.
    assert jnp.allclose(out, ref, atol=5e-2, rtol=5e-2), (out, ref)

    print("KERNEL_OK")
</pallas_src>

<mosaic_0001>
module attributes {stable_mosaic.version = 11 : i64} {
  func.func @critic_kernel(%arg0: i32, %arg1: memref<8x128xbf16, #tpu.memory_space<vmem>>, %arg2: memref<128x400xbf16, #tpu.memory_space<vmem>>, %arg3: memref<1x400xf32, #tpu.memory_space<vmem>>, %arg4: memref<400x304xbf16, #tpu.memory_space<vmem>>, %arg5: memref<1x304xf32, #tpu.memory_space<vmem>>, %arg6: memref<304x8xbf16, #tpu.memory_space<vmem>>, %arg7: memref<1x8xf32, #tpu.memory_space<vmem>>, %arg8: memref<8x8xf32, #tpu.memory_space<vmem>>) attributes {dimension_semantics = [#tpu.dimension_semantics<parallel>], iteration_bounds = array<i64: 1>, scalar_prefetch = 0 : i64, scratch_operands = 0 : i64, tpu.core_type = #tpu.core_type<tc>, window_params = [{transform_indices = @transform_0, window_bounds = array<i64: 8, 128>}, {pipeline_mode = #tpu.pipeline_mode<synchronous>, transform_indices = @transform_1, window_bounds = array<i64: 128, 400>}, {pipeline_mode = #tpu.pipeline_mode<synchronous>, transform_indices = @transform_2, window_bounds = array<i64: 1, 400>}, {pipeline_mode = #tpu.pipeline_mode<synchronous>, transform_indices = @transform_3, window_bounds = array<i64: 400, 304>}, {pipeline_mode = #tpu.pipeline_mode<synchronous>, transform_indices = @transform_4, window_bounds = array<i64: 1, 304>}, {pipeline_mode = #tpu.pipeline_mode<synchronous>, transform_indices = @transform_5, window_bounds = array<i64: 304, 8>}, {pipeline_mode = #tpu.pipeline_mode<synchronous>, transform_indices = @transform_6, window_bounds = array<i64: 1, 8>}, {transform_indices = @transform_7, window_bounds = array<i64: 8, 8>}]} {
    %c0 = arith.constant 0 : index
    %c0_0 = arith.constant 0 : index
    %0 = vector.load %arg1[%c0, %c0_0] : memref<8x128xbf16, #tpu.memory_space<vmem>>, vector<8x128xbf16>
    %c0_1 = arith.constant 0 : index
    %c0_2 = arith.constant 0 : index
    %1 = vector.load %arg2[%c0_1, %c0_2] : memref<128x400xbf16, #tpu.memory_space<vmem>>, vector<128x400xbf16>
    %cst = arith.constant dense<0.000000e+00> : vector<8x400xf32>
    %2 = tpu.matmul %0, %1, %cst {dimension_numbers = #tpu.dot_dimension_numbers<[1], [0], [0], [1], [0, 0, 1, 1], [], []>} : vector<8x128xbf16>, vector<128x400xbf16>, vector<8x400xf32> -> vector<8x400xf32>
    %c0_3 = arith.constant 0 : index
    %c0_4 = arith.constant 0 : index
    %3 = vector.load %arg3[%c0_3, %c0_4] : memref<1x400xf32, #tpu.memory_space<vmem>>, vector<1x400xf32>
    %4 = vector.broadcast %3 : vector<1x400xf32> to vector<8x400xf32>
    %5 = arith.addf %2, %4 : vector<8x400xf32>
    %cst_5 = arith.constant 0.000000e+00 : f32
    %6 = vector.broadcast %cst_5 : f32 to vector<8x400xf32>
    %7 = arith.maximumf %5, %6 : vector<8x400xf32>
    %8 = arith.truncf %7 : vector<8x400xf32> to vector<8x400xbf16>
    %c0_6 = arith.constant 0 : index
    %c0_7 = arith.constant 0 : index
    %9 = vector.load %arg4[%c0_6, %c0_7] : memref<400x304xbf16, #tpu.memory_space<vmem>>, vector<400x304xbf16>
    %cst_8 = arith.constant dense<0.000000e+00> : vector<8x304xf32>
    %10 = tpu.matmul %8, %9, %cst_8 {dimension_numbers = #tpu.dot_dimension_numbers<[1], [0], [0], [1], [0, 0, 1, 1], [], []>} : vector<8x400xbf16>, vector<400x304xbf16>, vector<8x304xf32> -> vector<8x304xf32>
    %c0_9 = arith.constant 0 : index
    %c0_10 = arith.constant 0 : index
    %11 = vector.load %arg5[%c0_9, %c0_10] : memref<1x304xf32, #tpu.memory_space<vmem>>, vector<1x304xf32>
    %12 = vector.broadcast %11 : vector<1x304xf32> to vector<8x304xf32>
    %13 = arith.addf %10, %12 : vector<8x304xf32>
    %cst_11 = arith.constant 0.000000e+00 : f32
    %14 = vector.broadcast %cst_11 : f32 to vector<8x304xf32>
    %15 = arith.maximumf %13, %14 : vector<8x304xf32>
    %16 = arith.truncf %15 : vector<8x304xf32> to vector<8x304xbf16>
    %c0_12 = arith.constant 0 : index
    %c0_13 = arith.constant 0 : index
    %17 = vector.load %arg6[%c0_12, %c0_13] : memref<304x8xbf16, #tpu.memory_space<vmem>>, vector<304x8xbf16>
    %cst_14 = arith.constant dense<0.000000e+00> : vector<8x8xf32>
    %18 = tpu.matmul %16, %17, %cst_14 {dimension_numbers = #tpu.dot_dimension_numbers<[1], [0], [0], [1], [0, 0, 1, 1], [], []>} : vector<8x304xbf16>, vector<304x8xbf16>, vector<8x8xf32> -> vector<8x8xf32>
    %c0_15 = arith.constant 0 : index
    %c0_16 = arith.constant 0 : index
    %19 = vector.load %arg7[%c0_15, %c0_16] : memref<1x8xf32, #tpu.memory_space<vmem>>, vector<1x8xf32>
    %20 = vector.broadcast %19 : vector<1x8xf32> to vector<8x8xf32>
    %21 = arith.addf %18, %20 : vector<8x8xf32>
    %c0_17 = arith.constant 0 : index
    %c0_18 = arith.constant 0 : index
    %22 = vector.load %arg8[%c0_17, %c0_18] : memref<8x8xf32, #tpu.memory_space<vmem>>, vector<8x8xf32>
    tpu.vector_store %arg8[%c0_17, %c0_18], %21 {strides = array<i32>} : memref<8x8xf32, #tpu.memory_space<vmem>>, vector<8x8xf32>,
    return
  }
  func.func @transform_0(%arg0: i32) -> (i32, i32) {
    %c0_i32 = arith.constant 0 : i32
    %c0_i32_0 = arith.constant 0 : i32
    return %arg0, %c0_i32 : i32, i32
  }
  func.func @transform_1(%arg0: i32) -> (i32, i32) {
    %c0_i32 = arith.constant 0 : i32
    %c0_i32_0 = arith.constant 0 : i32
    %c0_i32_1 = arith.constant 0 : i32
    return %c0_i32, %c0_i32_0 : i32, i32
  }
  func.func @transform_2(%arg0: i32) -> (i32, i32) {
    %c0_i32 = arith.constant 0 : i32
    %c0_i32_0 = arith.constant 0 : i32
    %c0_i32_1 = arith.constant 0 : i32
    return %c0_i32, %c0_i32_0 : i32, i32
  }
  func.func @transform_3(%arg0: i32) -> (i32, i32) {
    %c0_i32 = arith.constant 0 : i32
    %c0_i32_0 = arith.constant 0 : i32
    %c0_i32_1 = arith.constant 0 : i32
    return %c0_i32, %c0_i32_0 : i32, i32
  }
  func.func @transform_4(%arg0: i32) -> (i32, i32) {
    %c0_i32 = arith.constant 0 : i32
    %c0_i32_0 = arith.constant 0 : i32
    %c0_i32_1 = arith.constant 0 : i32
    return %c0_i32, %c0_i32_0 : i32, i32
  }
  func.func @transform_5(%arg0: i32) -> (i32, i32) {
    %c0_i32 = arith.constant 0 : i32
    %c0_i32_0 = arith.constant 0 : i32
    %c0_i32_1 = arith.constant 0 : i32
    return %c0_i32, %c0_i32_0 : i32, i32
  }
  func.func @transform_6(%arg0: i32) -> (i32, i32) {
    %c0_i32 = arith.constant 0 : i32
    %c0_i32_0 = arith.constant 0 : i32
    %c0_i32_1 = arith.constant 0 : i32
    return %c0_i32, %c0_i32_0 : i32, i32
  }
  func.func @transform_7(%arg0: i32) -> (i32, i32) {
    %c0_i32 = arith.constant 0 : i32
    %c0_i32_0 = arith.constant 0 : i32
    return %arg0, %c0_i32 : i32, i32
  }
}

</mosaic_0001>

<llo_original>
// kernel: critic_forward.1
$region0: #{critic_forward.1}
  #allocation0 [shape = 'u32[]', space=smem, size = 0x4, offset = 0x4, fixed_abs, tag = 'smem constant byte address 0x4 - core index']
  #allocation1 [shape = 'u32[144,128]{1,0:T(1,128)}', space=vmem, size = 0x12000, scoped, tag = 'internal scratch']
  %s0 = inlined_call_operand.vmem [shape: bf16[8,128], index: 0, kind: input, shape index: {}]
  %s1 = inlined_call_operand.vmem [shape: bf16[128,400], index: 1, kind: input, shape index: {}]
  %s2 = inlined_call_operand.vmem [shape: f32[1,400], index: 2, kind: input, shape index: {}]
  %s3 = inlined_call_operand.vmem [shape: bf16[400,304], index: 3, kind: input, shape index: {}]
  %s4 = inlined_call_operand.vmem [shape: f32[1,304], index: 4, kind: input, shape index: {}]
  %s5 = inlined_call_operand.vmem [shape: bf16[304,8], index: 5, kind: input, shape index: {}]
  %s6 = inlined_call_operand.vmem [shape: f32[1,8], index: 6, kind: input, shape index: {}]
  %s7 = inlined_call_operand.vmem [shape: f32[8,8], index: 7, kind: output, shape index: {}]
  %s8 = sld [smem:[#allocation0]]
  $region38: #{critic_forward.1} parent=0
    _
  %s10 = ssub.s32 1, %s8
  %s11 = scalar_select 0, %s10, %s8
  // Predicated region
  $region2: #{critic_forward.1} parent=0 // pred_check
    _
  $region3: #{critic_forward.1} parent=0 // pred_check_branch
    %13 = sbr.rel (0) target = $region5
  $region4: #{critic_forward.1} parent=0 // pred_region
    _
  $region5: #{critic_forward.1} parent=0 // pred_fallthru
    _
  // Predicated region
  $region6: #{critic_forward.1} parent=0 // pred_check
    _
  $region7: #{critic_forward.1} parent=0 // pred_check_branch
    %15 = sbr.rel (0) target = $region9
  $region8: #{critic_forward.1} parent=0 // pred_region
    _
  $region9: #{critic_forward.1} parent=0 // pred_fallthru
    _
  // Predicated region
  $region10: #{critic_forward.1} parent=0 // pred_check
    _
  $region11: #{critic_forward.1} parent=0 // pred_check_branch
    %17 = sbr.rel (0) target = $region13
  $region12: #{critic_forward.1} parent=0 // pred_region
    _
  $region13: #{critic_forward.1} parent=0 // pred_fallthru
    _
  // Predicated region
  $region14: #{critic_forward.1} parent=0 // pred_check
    _
  $region15: #{critic_forward.1} parent=0 // pred_check_branch
    %19 = sbr.rel (0) target = $region17
  $region16: #{critic_forward.1} parent=0 // pred_region
    _
  $region17: #{critic_forward.1} parent=0 // pred_fallthru
    _
  // Predicated region
  $region18: #{critic_forward.1} parent=0 // pred_check
    _
  $region19: #{critic_forward.1} parent=0 // pred_check_branch
    %21 = sbr.rel (0) target = $region21
  $region20: #{critic_forward.1} parent=0 // pred_region
    _
  $region21: #{critic_forward.1} parent=0 // pred_fallthru
    _
  // Predicated region
  $region22: #{critic_forward.1} parent=0 // pred_check
    _
  $region23: #{critic_forward.1} parent=0 // pred_check_branch
    %23 = sbr.rel (0) target = $region25
  $region24: #{critic_forward.1} parent=0 // pred_region
    _
  $region25: #{critic_forward.1} parent=0 // pred_fallthru
    _
  // Predicated region
  $region26: #{critic_forward.1} parent=0 // pred_check
    _
  $region27: #{critic_forward.1} parent=0 // pred_check_branch
    %25 = sbr.rel (0) target = $region29
  $region28: #{critic_forward.1} parent=0 // pred_region
    _
  $region29: #{critic_forward.1} parent=0 // pred_fallthru
    _
  %v27 = vld [vmem:[%s0] sm:$0xf]
  %v28 = vld [vmem:[%s1] sm:$0xff]
  %v29 = vld [vmem:[%s1 + $0x8] sm:$0xff]
  %v30 = vld [vmem:[%s1 + $0x10] sm:$0xff]
  %v31 = vld [vmem:[%s1 + $0x18] sm:$0xff]
  %v32 = vld [vmem:[%s1 + $0x20] sm:$0xff]
  %v33 = vld [vmem:[%s1 + $0x28] sm:$0xff]
  %v34 = vld [vmem:[%s1 + $0x30] sm:$0xff]
  %v35 = vld [vmem:[%s1 + $0x38] sm:$0xff]
  %v36 = vld [vmem:[%s1 + $0x40] sm:$0xff]
  %v37 = vld [vmem:[%s1 + $0x48] sm:$0xff]
  %v38 = vld [vmem:[%s1 + $0x50] sm:$0xff]
  %v39 = vld [vmem:[%s1 + $0x58] sm:$0xff]
  %v40 = vld [vmem:[%s1 + $0x60] sm:$0xff]
  %v41 = vld [vmem:[%s1 + $0x68] sm:$0xff]
  %v42 = vld [vmem:[%s1 + $0x70] sm:$0xff]
  %v43 = vld [vmem:[%s1 + $0x78] sm:$0xff]
  %v44 = vld [vmem:[%s1 + $0x80] sm:$0xff]
  %v45 = vld [vmem:[%s1 + $0x88] sm:$0xff]
  %v46 = vld [vmem:[%s1 + $0x90] sm:$0xff]
  %v47 = vld [vmem:[%s1 + $0x98] sm:$0xff]
  %v48 = vld [vmem:[%s1 + $0xa0] sm:$0xff]
  %v49 = vld [vmem:[%s1 + $0xa8] sm:$0xff]
  %v50 = vld [vmem:[%s1 + $0xb0] sm:$0xff]
  %v51 = vld [vmem:[%s1 + $0xb8] sm:$0xff]
  %v52 = vld [vmem:[%s1 + $0xc0] sm:$0xff]
  %v53 = vld [vmem:[%s1 + $0xc8] sm:$0xff]
  %v54 = vld [vmem:[%s1 + $0xd0] sm:$0xff]
  %v55 = vld [vmem:[%s1 + $0xd8] sm:$0xff]
  %v56 = vld [vmem:[%s1 + $0xe0] sm:$0xff]
  %v57 = vld [vmem:[%s1 + $0xe8] sm:$0xff]
  %v58 = vld [vmem:[%s1 + $0xf0] sm:$0xff]
  %v59 = vld [vmem:[%s1 + $0xf8] sm:$0xff]
  %v60 = vld [vmem:[%s2] sm:$0xf]
  %v62 = vlaneseq
  %v63 = vshrl.u32 %v62, 7
  %v64 = vsub.s32 0, %v63
  %v65 = vrot.slane %v60, %v64
  %v66 = vlaneseq
  %v67 = vshrl.u32 %v66, 7
  %v68 = vsub.s32 1, %v67
  %v69 = vrot.slane %v60, %v68
  %v70 = vlaneseq
  %v71 = vshrl.u32 %v70, 7
  %v72 = vsub.s32 2, %v71
  %v73 = vrot.slane %v60, %v72
  %v74 = vlaneseq
  %v75 = vshrl.u32 %v74, 7
  %v76 = vsub.s32 3, %v75
  %v77 = vrot.slane %v60, %v76
  %v114 = vunpack.c.l.b16 %v28
  %v115 = vunpack.c.h.b16 %v28
  %v116 = vunpack.c.l.b16 %v29
  %v117 = vunpack.c.h.b16 %v29
  %v118 = vunpack.c.l.b16 %v30
  %v119 = vunpack.c.h.b16 %v30
  %v120 = vunpack.c.l.b16 %v31
  %v121 = vunpack.c.h.b16 %v31
  %v122 = vunpack.c.l.b16 %v32
  %v123 = vunpack.c.h.b16 %v32
  %v124 = vunpack.c.l.b16 %v33
  %v125 = vunpack.c.h.b16 %v33
  %v126 = vunpack.c.l.b16 %v34
  %v127 = vunpack.c.h.b16 %v34
  %v128 = vunpack.c.l.b16 %v35
  %v129 = vunpack.c.h.b16 %v35
  %v130 = vunpack.c.l.b16 %v36
  %v131 = vunpack.c.h.b16 %v36
  %v132 = vunpack.c.l.b16 %v37
  %v133 = vunpack.c.h.b16 %v37
  %v134 = vunpack.c.l.b16 %v38
  %v135 = vunpack.c.h.b16 %v38
  %v136 = vunpack.c.l.b16 %v39
  %v137 = vunpack.c.h.b16 %v39
  %v138 = vunpack.c.l.b16 %v40
  %v139 = vunpack.c.h.b16 %v40
  %v140 = vunpack.c.l.b16 %v41
  %v141 = vunpack.c.h.b16 %v41
  %v142 = vunpack.c.l.b16 %v42
  %v143 = vunpack.c.h.b16 %v42
  %v144 = vunpack.c.l.b16 %v43
  %v145 = vunpack.c.h.b16 %v43
  %v146 = vunpack.c.l.b16 %v44
  %v147 = vunpack.c.h.b16 %v44
  %v148 = vunpack.c.l.b16 %v45
  %v149 = vunpack.c.h.b16 %v45
  %v150 = vunpack.c.l.b16 %v46
  %v151 = vunpack.c.h.b16 %v46
  %v152 = vunpack.c.l.b16 %v47
  %v153 = vunpack.c.h.b16 %v47
  %v154 = vunpack.c.l.b16 %v48
  %v155 = vunpack.c.h.b16 %v48
  %v156 = vunpack.c.l.b16 %v49
  %v157 = vunpack.c.h.b16 %v49
  %v158 = vunpack.c.l.b16 %v50
  %v159 = vunpack.c.h.b16 %v50
  %v160 = vunpack.c.l.b16 %v51
  %v161 = vunpack.c.h.b16 %v51
  %v162 = vunpack.c.l.b16 %v52
  %v163 = vunpack.c.h.b16 %v52
  %v164 = vunpack.c.l.b16 %v53
  %v165 = vunpack.c.h.b16 %v53
  %v166 = vunpack.c.l.b16 %v54
  %v167 = vunpack.c.h.b16 %v54
  %v168 = vunpack.c.l.b16 %v55
  %v169 = vunpack.c.h.b16 %v55
  %v170 = vunpack.c.l.b16 %v56
  %v171 = vunpack.c.h.b16 %v56
  %v172 = vunpack.c.l.b16 %v57
  %v173 = vunpack.c.h.b16 %v57
  %v174 = vunpack.c.l.b16 %v58
  %v175 = vunpack.c.h.b16 %v58
  %v176 = vunpack.c.l.b16 %v59
  %v177 = vunpack.c.h.b16 %v59
  %v178 = vpack.c.b16 %v118, %v114
  %v179 = vpack.c.b16 %v119, %v115
  %v180 = vpack.c.b16 %v120, %v116
  %v181 = vpack.c.b16 %v121, %v117
  %v182 = vpack.c.b16 %v126, %v122
  %v183 = vpack.c.b16 %v127, %v123
  %v184 = vpack.c.b16 %v128, %v124
  %v185 = vpack.c.b16 %v129, %v125
  %v186 = vpack.c.b16 %v134, %v130
  %v187 = vpack.c.b16 %v135, %v131
  %v188 = vpack.c.b16 %v136, %v132
  %v189 = vpack.c.b16 %v137, %v133
  %v190 = vpack.c.b16 %v142, %v138
  %v191 = vpack.c.b16 %v143, %v139
  %v192 = vpack.c.b16 %v144, %v140
  %v193 = vpack.c.b16 %v145, %v141
  %v194 = vpack.c.b16 %v150, %v146
  %v195 = vpack.c.b16 %v151, %v147
  %v196 = vpack.c.b16 %v152, %v148
  %v197 = vpack.c.b16 %v153, %v149
  %v198 = vpack.c.b16 %v158, %v154
  %v199 = vpack.c.b16 %v159, %v155
  %v200 = vpack.c.b16 %v160, %v156
  %v201 = vpack.c.b16 %v161, %v157
  %v202 = vpack.c.b16 %v166, %v162
  %v203 = vpack.c.b16 %v167, %v163
  %v204 = vpack.c.b16 %v168, %v164
  %v205 = vpack.c.b16 %v169, %v165
  %v206 = vpack.c.b16 %v174, %v170
  %v207 = vpack.c.b16 %v175, %v171
  %v208 = vpack.c.b16 %v176, %v172
  %v209 = vpack.c.b16 %v177, %v173
  %242 = vmatprep.subr.bf16.mxu0 %v179
  %243 = vmatpush1.bf16.msra.mxu0 %v178
  %244 = vmatprep.subr.bf16.mxu0 %v183
  %245 = vmatpush1.bf16.msra.mxu0 %v182
  %246 = vmatprep.subr.bf16.mxu0 %v187
  %247 = vmatpush1.bf16.msra.mxu0 %v186
  %248 = vmatprep.subr.bf16.mxu0 %v191
  %249 = vmatpush1.bf16.msra.mxu0 %v190
  %250 = vmatprep.subr.bf16.mxu0 %v195
  %251 = vmatpush1.bf16.msra.mxu0 %v194
  %252 = vmatprep.subr.bf16.mxu0 %v199
  %253 = vmatpush1.bf16.msra.mxu0 %v198
  %254 = vmatprep.subr.bf16.mxu0 %v203
  %255 = vmatpush1.bf16.msra.mxu0 %v202
  %256 = vmatprep.subr.bf16.mxu0 %v207
  %257 = vmatpush1.bf16.msra.mxu0 %v206
  %258 = vmatprep.subr.bf16.mxu0 0
  %259 = vmatpush1.bf16.msra.mxu0 0
  %260 = vmatprep.subr.bf16.mxu0 0
  %261 = vmatpush1.bf16.msra.mxu0 0
  %262 = vmatprep.subr.bf16.mxu0 0
  %263 = vmatpush1.bf16.msra.mxu0 0
  %264 = vmatprep.subr.bf16.mxu0 0
  %265 = vmatpush1.bf16.msra.mxu0 0
  %266 = vmatprep.subr.bf16.mxu0 0
  %267 = vmatpush1.bf16.msra.mxu0 0
  %268 = vmatprep.subr.bf16.mxu0 0
  %269 = vmatpush1.bf16.msra.mxu0 0
  %270 = vmatprep.subr.bf16.mxu0 0
  %271 = vmatpush1.bf16.msra.mxu0 0
  %272 = vmatprep.subr.bf16.mxu0 0
  %273 = vmatpush1.bf16.msra.mxu0 0
  %274 = vmatprep.mubr.bf16.mxu0 0
  %275 = vmatmul.mubr.bf16.gmra.mrb[0].mxu0 %v27
  %v276 = vpop.f32.mrb[0].mxu0
  %v277 = vadd.f32 %v65, %v276
  %v278 = vpop.f32.mrb[0].mxu0
  %v279 = vadd.f32 %v69, %v278
  %v280 = vpop.f32.mrb[0].mxu0
  %v281 = vpop.f32.mrb[0].mxu0
  %282 = vdwg.mxu0
  %283 = vmatprep.subr.bf16.mxu0 %v181
  %284 = vmatpush1.bf16.msra.mxu0 %v180
  %285 = vmatprep.subr.bf16.mxu0 %v185
  %286 = vmatpush1.bf16.msra.mxu0 %v184
  %287 = vmatprep.subr.bf16.mxu0 %v189
  %288 = vmatpush1.bf16.msra.mxu0 %v188
  %289 = vmatprep.subr.bf16.mxu0 %v193
  %290 = vmatpush1.bf16.msra.mxu0 %v192
  %291 = vmatprep.subr.bf16.mxu0 %v197
  %292 = vmatpush1.bf16.msra.mxu0 %v196
  %293 = vmatprep.subr.bf16.mxu0 %v201
  %294 = vmatpush1.bf16.msra.mxu0 %v200
  %295 = vmatprep.subr.bf16.mxu0 %v205
  %296 = vmatpush1.bf16.msra.mxu0 %v204
  %297 = vmatprep.subr.bf16.mxu0 %v209
  %298 = vmatpush1.bf16.msra.mxu0 %v208
  %299 = vmatprep.subr.bf16.mxu0 0
  %300 = vmatpush1.bf16.msra.mxu0 0
  %301 = vmatprep.subr.bf16.mxu0 0
  %302 = vmatpush1.bf16.msra.mxu0 0
  %303 = vmatprep.subr.bf16.mxu0 0
  %304 = vmatpush1.bf16.msra.mxu0 0
  %305 = vmatprep.subr.bf16.mxu0 0
  %306 = vmatpush1.bf16.msra.mxu0 0
  %307 = vmatprep.subr.bf16.mxu0 0
  %308 = vmatpush1.bf16.msra.mxu0 0
  %309 = vmatprep.subr.bf16.mxu0 0
  %310 = vmatpush1.bf16.msra.mxu0 0
  %311 = vmatprep.subr.bf16.mxu0 0
  %312 = vmatpush1.bf16.msra.mxu0 0
  %313 = vmatprep.subr.bf16.mxu0 0
  %314 = vmatpush1.bf16.msra.mxu0 0
  %315 = vmatprep.mubr.bf16.mxu0 0
  %316 = vmatmul.mubr.bf16.gmra.mrb[0].mxu0 %v27
  %v317 = vpop.f32.mrb[0].mxu0
  %v318 = vadd.f32 %v73, %v317
  %v319 = vpop.f32.mrb[0].mxu0
  %v320 = vadd.f32 %v77, %v319
  %v321 = vpop.f32.mrb[0].mxu0
  %v322 = vpop.f32.mrb[0].mxu0
  %323 = vdwg.mxu0
  %v324 = vmax.f32 %v277, 0.0
  %v325 = vmax.f32 %v279, 0.0
  %v326 = vmax.f32 %v318, 0.0
  %v327 = vmax.f32 %v320, 0.0
  %v328 = vpack.c.bf16 %v324, %v324
  %v329 = vpack.c.bf16 %v325, %v325
  %v330 = vpack.c.bf16 %v326, %v326
  %v331 = vpack.c.bf16 %v327, %v327
  %v332 = vld [vmem:[%s3] sm:$0xff]
  %v333 = vld [vmem:[%s3 + $0x8] sm:$0xf]
  %v334 = vld [vmem:[%s3 + $0xc] sm:$0xff]
  %v335 = vld [vmem:[%s3 + $0x14] sm:$0xf]
  %v336 = vld [vmem:[%s3 + $0x18] sm:$0xff]
  %v337 = vld [vmem:[%s3 + $0x20] sm:$0xf]
  %v338 = vld [vmem:[%s3 + $0x24] sm:$0xff]
  %v339 = vld [vmem:[%s3 + $0x2c] sm:$0xf]
  %v340 = vld [vmem:[%s3 + $0x30] sm:$0xff]
  %v341 = vld [vmem:[%s3 + $0x38] sm:$0xf]
  %v342 = vld [vmem:[%s3 + $0x3c] sm:$0xff]
  %v343 = vld [vmem:[%s3 + $0x44] sm:$0xf]
  %v344 = vld [vmem:[%s3 + $0x48] sm:$0xff]
  %v345 = vld [vmem:[%s3 + $0x50] sm:$0xf]
  %v346 = vld [vmem:[%s3 + $0x54] sm:$0xff]
  %v347 = vld [vmem:[%s3 + $0x5c] sm:$0xf]
  %v348 = vld [vmem:[%s3 + $0x60] sm:$0xff]
  %v349 = vld [vmem:[%s3 + $0x68] sm:$0xf]
  %v350 = vld [vmem:[%s3 + $0x6c] sm:$0xff]
  %v351 = vld [vmem:[%s3 + $0x74] sm:$0xf]
  %v352 = vld [vmem:[%s3 + $0x78] sm:$0xff]
  %v353 = vld [vmem:[%s3 + $0x80] sm:$0xf]
  %v354 = vld [vmem:[%s3 + $0x84] sm:$0xff]
  %v355 = vld [vmem:[%s3 + $0x8c] sm:$0xf]
  %v356 = vld [vmem:[%s3 + $0x90] sm:$0xff]
  %v357 = vld [vmem:[%s3 + $0x98] sm:$0xf]
  %v358 = vld [vmem:[%s3 + $0x9c] sm:$0xff]
  %v359 = vld [vmem:[%s3 + $0xa4] sm:$0xf]
  %v360 = vld [vmem:[%s3 + $0xa8] sm:$0xff]
  %v361 = vld [vmem:[%s3 + $0xb0] sm:$0xf]
  %v362 = vld [vmem:[%s3 + $0xb4] sm:$0xff]
  %v363 = vld [vmem:[%s3 + $0xbc] sm:$0xf]
  %v364 = vld [vmem:[%s3 + $0xc0] sm:$0xff]
  %v365 = vld [vmem:[%s3 + $0xc8] sm:$0xf]
  %v366 = vld [vmem:[%s3 + $0xcc] sm:$0xff]
  %v367 = vld [vmem:[%s3 + $0xd4] sm:$0xf]
  %v368 = vld [vmem:[%s3 + $0xd8] sm:$0xff]
  %v369 = vld [vmem:[%s3 + $0xe0] sm:$0xf]
  %v370 = vld [vmem:[%s3 + $0xe4] sm:$0xff]
  %v371 = vld [vmem:[%s3 + $0xec] sm:$0xf]
  %v372 = vld [vmem:[%s3 + $0xf0] sm:$0xff]
  %v373 = vld [vmem:[%s3 + $0xf8] sm:$0xf]
  %v374 = vld [vmem:[%s3 + $0xfc] sm:$0xff]
  %v375 = vld [vmem:[%s3 + $0x104] sm:$0xf]
  %v376 = vld [vmem:[%s3 + $0x108] sm:$0xff]
  %v377 = vld [vmem:[%s3 + $0x110] sm:$0xf]
  %v378 = vld [vmem:[%s3 + $0x114] sm:$0xff]
  %v379 = vld [vmem:[%s3 + $0x11c] sm:$0xf]
  %v380 = vld [vmem:[%s3 + $0x120] sm:$0xff]
  %v381 = vld [vmem:[%s3 + $0x128] sm:$0xf]
  %v382 = vld [vmem:[%s3 + $0x12c] sm:$0xff]
  %v383 = vld [vmem:[%s3 + $0x134] sm:$0xf]
  %v384 = vld [vmem:[%s3 + $0x138] sm:$0xff]
  %v385 = vld [vmem:[%s3 + $0x140] sm:$0xf]
  %v386 = vld [vmem:[%s3 + $0x144] sm:$0xff]
  %v387 = vld [vmem:[%s3 + $0x14c] sm:$0xf]
  %v388 = vld [vmem:[%s3 + $0x150] sm:$0xff]
  %v389 = vld [vmem:[%s3 + $0x158] sm:$0xf]
  %v390 = vld [vmem:[%s3 + $0x15c] sm:$0xff]
  %v391 = vld [vmem:[%s3 + $0x164] sm:$0xf]
  %v392 = vld [vmem:[%s3 + $0x168] sm:$0xff]
  %v393 = vld [vmem:[%s3 + $0x170] sm:$0xf]
  %v394 = vld [vmem:[%s3 + $0x174] sm:$0xff]
  %v395 = vld [vmem:[%s3 + $0x17c] sm:$0xf]
  %v396 = vld [vmem:[%s3 + $0x180] sm:$0xff]
  %v397 = vld [vmem:[%s3 + $0x188] sm:$0xf]
  %v398 = vld [vmem:[%s3 + $0x18c] sm:$0xff]
  %v399 = vld [vmem:[%s3 + $0x194] sm:$0xf]
  %v400 = vld [vmem:[%s3 + $0x198] sm:$0xff]
  %v401 = vld [vmem:[%s3 + $0x1a0] sm:$0xf]
  %v402 = vld [vmem:[%s3 + $0x1a4] sm:$0xff]
  %v403 = vld [vmem:[%s3 + $0x1ac] sm:$0xf]
  %v404 = vld [vmem:[%s3 + $0x1b0] sm:$0xff]
  %v405 = vld [vmem:[%s3 + $0x1b8] sm:$0xf]
  %v406 = vld [vmem:[%s3 + $0x1bc] sm:$0xff]
  %v407 = vld [vmem:[%s3 + $0x1c4] sm:$0xf]
  %v408 = vld [vmem:[%s3 + $0x1c8] sm:$0xff]
  %v409 = vld [vmem:[%s3 + $0x1d0] sm:$0xf]
  %v410 = vld [vmem:[%s3 + $0x1d4] sm:$0xff]
  %v411 = vld [vmem:[%s3 + $0x1dc] sm:$0xf]
  %v412 = vld [vmem:[%s3 + $0x1e0] sm:$0xff]
  %v413 = vld [vmem:[%s3 + $0x1e8] sm:$0xf]
  %v414 = vld [vmem:[%s3 + $0x1ec] sm:$0xff]
  %v415 = vld [vmem:[%s3 + $0x1f4] sm:$0xf]
  %v416 = vld [vmem:[%s3 + $0x1f8] sm:$0xff]
  %v417 = vld [vmem:[%s3 + $0x200] sm:$0xf]
  %v418 = vld [vmem:[%s3 + $0x204] sm:$0xff]
  %v419 = vld [vmem:[%s3 + $0x20c] sm:$0xf]
  %v420 = vld [vmem:[%s3 + $0x210] sm:$0xff]
  %v421 = vld [vmem:[%s3 + $0x218] sm:$0xf]
  %v422 = vld [vmem:[%s3 + $0x21c] sm:$0xff]
  %v423 = vld [vmem:[%s3 + $0x224] sm:$0xf]
  %v424 = vld [vmem:[%s3 + $0x228] sm:$0xff]
  %v425 = vld [vmem:[%s3 + $0x230] sm:$0xf]
  %v426 = vld [vmem:[%s3 + $0x234] sm:$0xff]
  %v427 = vld [vmem:[%s3 + $0x23c] sm:$0xf]
  %v428 = vld [vmem:[%s3 + $0x240] sm:$0xff]
  %v429 = vld [vmem:[%s3 + $0x248] sm:$0xf]
  %v430 = vld [vmem:[%s3 + $0x24c] sm:$0xff]
  %v431 = vld [vmem:[%s3 + $0x254] sm:$0xf]
  %v432 = vld [vmem:[%s4] sm:$0x7]
  %v434 = vlaneseq
  %v435 = vshrl.u32 %v434, 7
  %v436 = vsub.s32 0, %v435
  %v437 = vrot.slane %v432, %v436
  %v438 = vlaneseq
  %v439 = vshrl.u32 %v438, 7
  %v440 = vsub.s32 1, %v439
  %v441 = vrot.slane %v432, %v440
  %v442 = vlaneseq
  %v443 = vshrl.u32 %v442, 7
  %v444 = vsub.s32 2, %v443
  %v445 = vrot.slane %v432, %v444
  %v549 = vunpack.c.l.b16 %v332
  %v550 = vunpack.c.h.b16 %v332
  %v551 = vunpack.c.l.b16 %v333
  %v552 = vunpack.c.l.b16 %v334
  %v553 = vunpack.c.h.b16 %v334
  %v554 = vunpack.c.l.b16 %v335
  %v555 = vunpack.c.l.b16 %v336
  %v556 = vunpack.c.h.b16 %v336
  %v557 = vunpack.c.l.b16 %v337
  %v558 = vunpack.c.l.b16 %v338
  %v559 = vunpack.c.h.b16 %v338
  %v560 = vunpack.c.l.b16 %v339
  %v561 = vunpack.c.l.b16 %v340
  %v562 = vunpack.c.h.b16 %v340
  %v563 = vunpack.c.l.b16 %v341
  %v564 = vunpack.c.l.b16 %v342
  %v565 = vunpack.c.h.b16 %v342
  %v566 = vunpack.c.l.b16 %v343
  %v567 = vunpack.c.l.b16 %v344
  %v568 = vunpack.c.h.b16 %v344
  %v569 = vunpack.c.l.b16 %v345
  %v570 = vunpack.c.l.b16 %v346
  %v571 = vunpack.c.h.b16 %v346
  %v572 = vunpack.c.l.b16 %v347
  %v573 = vunpack.c.l.b16 %v348
  %v574 = vunpack.c.h.b16 %v348
  %v575 = vunpack.c.l.b16 %v349
  %v576 = vunpack.c.l.b16 %v350
  %v577 = vunpack.c.h.b16 %v350
  %v578 = vunpack.c.l.b16 %v351
  %v579 = vunpack.c.l.b16 %v352
  %v580 = vunpack.c.h.b16 %v352
  %v581 = vunpack.c.l.b16 %v353
  %v582 = vunpack.c.l.b16 %v354
  %v583 = vunpack.c.h.b16 %v354
  %v584 = vunpack.c.l.b16 %v355
  %v585 = vunpack.c.l.b16 %v356
  %v586 = vunpack.c.h.b16 %v356
  %v587 = vunpack.c.l.b16 %v357
  %v588 = vunpack.c.l.b16 %v358
  %v589 = vunpack.c.h.b16 %v358
  %v590 = vunpack.c.l.b16 %v359
  %v591 = vunpack.c.l.b16 %v360
  %v592 = vunpack.c.h.b16 %v360
  %v593 = vunpack.c.l.b16 %v361
  %v594 = vunpack.c.l.b16 %v362
  %v595 = vunpack.c.h.b16 %v362
  %v596 = vunpack.c.l.b16 %v363
  %v597 = vunpack.c.l.b16 %v364
  %v598 = vunpack.c.h.b16 %v364
  %v599 = vunpack.c.l.b16 %v365
  %v600 = vunpack.c.l.b16 %v366
  %v601 = vunpack.c.h.b16 %v366
  %v602 = vunpack.c.l.b16 %v367
  %v603 = vunpack.c.l.b16 %v368
  %v604 = vunpack.c.h.b16 %v368
  %v605 = vunpack.c.l.b16 %v369
  %v606 = vunpack.c.l.b16 %v370
  %v607 = vunpack.c.h.b16 %v370
  %v608 = vunpack.c.l.b16 %v371
  %v609 = vunpack.c.l.b16 %v372
  %v610 = vunpack.c.h.b16 %v372
  %v611 = vunpack.c.l.b16 %v373
  %v612 = vunpack.c.l.b16 %v374
  %v613 = vunpack.c.h.b16 %v374
  %v614 = vunpack.c.l.b16 %v375
  %v615 = vunpack.c.l.b16 %v376
  %v616 = vunpack.c.h.b16 %v376
  %v617 = vunpack.c.l.b16 %v377
  %v618 = vunpack.c.l.b16 %v378
  %v619 = vunpack.c.h.b16 %v378
  %v620 = vunpack.c.l.b16 %v379
  %v621 = vunpack.c.l.b16 %v380
  %v622 = vunpack.c.h.b16 %v380
  %v623 = vunpack.c.l.b16 %v381
  %v624 = vunpack.c.l.b16 %v382
  %v625 = vunpack.c.h.b16 %v382
  %v626 = vunpack.c.l.b16 %v383
  %v627 = vunpack.c.l.b16 %v384
  %v628 = vunpack.c.h.b16 %v384
  %v629 = vunpack.c.l.b16 %v385
  %v630 = vunpack.c.l.b16 %v386
  %v631 = vunpack.c.h.b16 %v386
  %v632 = vunpack.c.l.b16 %v387
  %v633 = vunpack.c.l.b16 %v388
  %v634 = vunpack.c.h.b16 %v388
  %v635 = vunpack.c.l.b16 %v389
  %v636 = vunpack.c.l.b16 %v390
  %v637 = vunpack.c.h.b16 %v390
  %v638 = vunpack.c.l.b16 %v391
  %v639 = vunpack.c.l.b16 %v392
  %v640 = vunpack.c.h.b16 %v392
  %v641 = vunpack.c.l.b16 %v393
  %v642 = vunpack.c.l.b16 %v394
  %v643 = vunpack.c.h.b16 %v394
  %v644 = vunpack.c.l.b16 %v395
  %v645 = vunpack.c.l.b16 %v396
  %v646 = vunpack.c.h.b16 %v396
  %v647 = vunpack.c.l.b16 %v397
  %v648 = vunpack.c.l.b16 %v398
  %v649 = vunpack.c.h.b16 %v398
  %v650 = vunpack.c.l.b16 %v399
  %v651 = vunpack.c.l.b16 %v400
  %v652 = vunpack.c.h.b16 %v400
  %v653 = vunpack.c.l.b16 %v401
  %v654 = vunpack.c.l.b16 %v402
  %v655 = vunpack.c.h.b16 %v402
  %v656 = vunpack.c.l.b16 %v403
  %v657 = vunpack.c.l.b16 %v404
  %v658 = vunpack.c.h.b16 %v404
  %v659 = vunpack.c.l.b16 %v405
  %v660 = vunpack.c.l.b16 %v406
  %v661 = vunpack.c.h.b16 %v406
  %v662 = vunpack.c.l.b16 %v407
  %v663 = vunpack.c.l.b16 %v408
  %v664 = vunpack.c.h.b16 %v408
  %v665 = vunpack.c.l.b16 %v409
  %v666 = vunpack.c.l.b16 %v410
  %v667 = vunpack.c.h.b16 %v410
  %v668 = vunpack.c.l.b16 %v411
  %v669 = vunpack.c.l.b16 %v412
  %v670 = vunpack.c.h.b16 %v412
  %v671 = vunpack.c.l.b16 %v413
  %v672 = vunpack.c.l.b16 %v414
  %v673 = vunpack.c.h.b16 %v414
  %v674 = vunpack.c.l.b16 %v415
  %v675 = vunpack.c.l.b16 %v416
  %v676 = vunpack.c.h.b16 %v416
  %v677 = vunpack.c.l.b16 %v417
  %v678 = vunpack.c.l.b16 %v418
  %v679 = vunpack.c.h.b16 %v418
  %v680 = vunpack.c.l.b16 %v419
  %v681 = vunpack.c.l.b16 %v420
  %v682 = vunpack.c.h.b16 %v420
  %v683 = vunpack.c.l.b16 %v421
  %v684 = vunpack.c.l.b16 %v422
  %v685 = vunpack.c.h.b16 %v422
  %v686 = vunpack.c.l.b16 %v423
  %v687 = vunpack.c.l.b16 %v424
  %v688 = vunpack.c.h.b16 %v424
  %v689 = vunpack.c.l.b16 %v425
  %v690 = vunpack.c.l.b16 %v426
  %v691 = vunpack.c.h.b16 %v426
  %v692 = vunpack.c.l.b16 %v427
  %v693 = vunpack.c.l.b16 %v428
  %v694 = vunpack.c.h.b16 %v428
  %v695 = vunpack.c.l.b16 %v429
  %v696 = vunpack.c.l.b16 %v430
  %v697 = vunpack.c.h.b16 %v430
  %v698 = vunpack.c.l.b16 %v431
  %v699 = vpack.c.b16 %v552, %v549
  %v700 = vpack.c.b16 %v553, %v550
  %v701 = vpack.c.b16 %v554, %v551
  %v702 = vpack.c.b16 %v558, %v555
  %v703 = vpack.c.b16 %v559, %v556
  %v704 = vpack.c.b16 %v560, %v557
  %v705 = vpack.c.b16 %v564, %v561
  %v706 = vpack.c.b16 %v565, %v562
  %v707 = vpack.c.b16 %v566, %v563
  %v708 = vpack.c.b16 %v570, %v567
  %v709 = vpack.c.b16 %v571, %v568
  %v710 = vpack.c.b16 %v572, %v569
  %v711 = vpack.c.b16 %v576, %v573
  %v712 = vpack.c.b16 %v577, %v574
  %v713 = vpack.c.b16 %v578, %v575
  %v714 = vpack.c.b16 %v582, %v579
  %v715 = vpack.c.b16 %v583, %v580
  %v716 = vpack.c.b16 %v584, %v581
  %v717 = vpack.c.b16 %v588, %v585
  %v718 = vpack.c.b16 %v589, %v586
  %v719 = vpack.c.b16 %v590, %v587
  %v720 = vpack.c.b16 %v594, %v591
  %v721 = vpack.c.b16 %v595, %v592
  %v722 = vpack.c.b16 %v596, %v593
  %v723 = vpack.c.b16 %v600, %v597
  %v724 = vpack.c.b16 %v601, %v598
  %v725 = vpack.c.b16 %v602, %v599
  %v726 = vpack.c.b16 %v606, %v603
  %v727 = vpack.c.b16 %v607, %v604
  %v728 = vpack.c.b16 %v608, %v605
  %v729 = vpack.c.b16 %v612, %v609
  %v730 = vpack.c.b16 %v613, %v610
  %v731 = vpack.c.b16 %v614, %v611
  %v732 = vpack.c.b16 %v618, %v615
  %v733 = vpack.c.b16 %v619, %v616
  %v734 = vpack.c.b16 %v620, %v617
  %v735 = vpack.c.b16 %v624, %v621
  %v736 = vpack.c.b16 %v625, %v622
  %v737 = vpack.c.b16 %v626, %v623
  %v738 = vpack.c.b16 %v630, %v627
  %v739 = vpack.c.b16 %v631, %v628
  %v740 = vpack.c.b16 %v632, %v629
  %v741 = vpack.c.b16 %v636, %v633
  %v742 = vpack.c.b16 %v637, %v634
  %v743 = vpack.c.b16 %v638, %v635
  %v744 = vpack.c.b16 %v642, %v639
  %v745 = vpack.c.b16 %v643, %v640
  %v746 = vpack.c.b16 %v644, %v641
  %v747 = vpack.c.b16 %v648, %v645
  %v748 = vpack.c.b16 %v649, %v646
  %v749 = vpack.c.b16 %v650, %v647
  %v750 = vpack.c.b16 %v654, %v651
  %v751 = vpack.c.b16 %v655, %v652
  %v752 = vpack.c.b16 %v656, %v653
  %v753 = vpack.c.b16 %v660, %v657
  %v754 = vpack.c.b16 %v661, %v658
  %v755 = vpack.c.b16 %v662, %v659
  %v756 = vpack.c.b16 %v666, %v663
  %v757 = vpack.c.b16 %v667, %v664
  %v758 = vpack.c.b16 %v668, %v665
  %v759 = vpack.c.b16 %v672, %v669
  %v760 = vpack.c.b16 %v673, %v670
  %v761 = vpack.c.b16 %v674, %v671
  %v762 = vpack.c.b16 %v678, %v675
  %v763 = vpack.c.b16 %v679, %v676
  %v764 = vpack.c.b16 %v680, %v677
  %v765 = vpack.c.b16 %v684, %v681
  %v766 = vpack.c.b16 %v685, %v682
  %v767 = vpack.c.b16 %v686, %v683
  %v768 = vpack.c.b16 %v690, %v687
  %v769 = vpack.c.b16 %v691, %v688
  %v770 = vpack.c.b16 %v692, %v689
  %v771 = vpack.c.b16 %v696, %v693
  %v772 = vpack.c.b16 %v697, %v694
  %v773 = vpack.c.b16 %v698, %v695
  %vm849 = vcmask 130048
  %v851 = vsel %vm849, %v331, 0
  %853 = vmatprep.subr.bf16.mxu0 %v700
  %854 = vmatpush1.bf16.msra.mxu0 %v699
  %855 = vmatprep.subr.bf16.mxu0 %v703
  %856 = vmatpush1.bf16.msra.mxu0 %v702
  %857 = vmatprep.subr.bf16.mxu0 %v706
  %858 = vmatpush1.bf16.msra.mxu0 %v705
  %859 = vmatprep.subr.bf16.mxu0 %v709
  %860 = vmatpush1.bf16.msra.mxu0 %v708
  %861 = vmatprep.subr.bf16.mxu0 %v712
  %862 = vmatpush1.bf16.msra.mxu0 %v711
  %863 = vmatprep.subr.bf16.mxu0 %v715
  %864 = vmatpush1.bf16.msra.mxu0 %v714
  %865 = vmatprep.subr.bf16.mxu0 %v718
  %866 = vmatpush1.bf16.msra.mxu0 %v717
  %867 = vmatprep.subr.bf16.mxu0 %v721
  %868 = vmatpush1.bf16.msra.mxu0 %v720
  %869 = vmatprep.subr.bf16.mxu0 %v724
  %870 = vmatpush1.bf16.msra.mxu0 %v723
  %871 = vmatprep.subr.bf16.mxu0 %v727
  %872 = vmatpush1.bf16.msra.mxu0 %v726
  %873 = vmatprep.subr.bf16.mxu0 %v730
  %874 = vmatpush1.bf16.msra.mxu0 %v729
  %875 = vmatprep.subr.bf16.mxu0 %v733
  %876 = vmatpush1.bf16.msra.mxu0 %v732
  %877 = vmatprep.subr.bf16.mxu0 %v736
  %878 = vmatpush1.bf16.msra.mxu0 %v735
  %879 = vmatprep.subr.bf16.mxu0 %v739
  %880 = vmatpush1.bf16.msra.mxu0 %v738
  %881 = vmatprep.subr.bf16.mxu0 %v742
  %882 = vmatpush1.bf16.msra.mxu0 %v741
  %883 = vmatprep.subr.bf16.mxu0 %v745
  %884 = vmatpush1.bf16.msra.mxu0 %v744
  %885 = vmatprep.mubr.bf16.mxu0 %v329
  %886 = vmatmul.mubr.bf16.gmra.mrb[0].mxu0 %v328
  %v887 = vpop.f32.mrb[0].mxu0
  %v888 = vadd.f32 %v437, %v887
  %v889 = vpop.f32.mrb[0].mxu0
  %v890 = vadd.f32 %v441, %v889
  %v891 = vpop.f32.mrb[0].mxu0
  %v892 = vpop.f32.mrb[0].mxu0
  %893 = vdwg.mxu0
  %894 = vmatprep.subr.bf16.mxu0 %v748
  %895 = vmatpush1.bf16.msra.mxu0 %v747
  %896 = vmatprep.subr.bf16.mxu0 %v751
  %897 = vmatpush1.bf16.msra.mxu0 %v750
  %898 = vmatprep.subr.bf16.mxu0 %v754
  %899 = vmatpush1.bf16.msra.mxu0 %v753
  %900 = vmatprep.subr.bf16.mxu0 %v757
  %901 = vmatpush1.bf16.msra.mxu0 %v756
  %902 = vmatprep.subr.bf16.mxu0 %v760
  %903 = vmatpush1.bf16.msra.mxu0 %v759
  %904 = vmatprep.subr.bf16.mxu0 %v763
  %905 = vmatpush1.bf16.msra.mxu0 %v762
  %906 = vmatprep.subr.bf16.mxu0 %v766
  %907 = vmatpush1.bf16.msra.mxu0 %v765
  %908 = vmatprep.subr.bf16.mxu0 %v769
  %909 = vmatpush1.bf16.msra.mxu0 %v768
  %910 = vmatprep.subr.bf16.mxu0 %v772
  %911 = vmatpush1.bf16.msra.mxu0 %v771
  %912 = vmatprep.subr.bf16.mxu0 0
  %913 = vmatpush1.bf16.msra.mxu0 0
  %914 = vmatprep.subr.bf16.mxu0 0
  %915 = vmatpush1.bf16.msra.mxu0 0
  %916 = vmatprep.subr.bf16.mxu0 0
  %917 = vmatpush1.bf16.msra.mxu0 0
  %918 = vmatprep.subr.bf16.mxu0 0
  %919 = vmatpush1.bf16.msra.mxu0 0
  %920 = vmatprep.subr.bf16.mxu0 0
  %921 = vmatpush1.bf16.msra.mxu0 0
  %922 = vmatprep.subr.bf16.mxu0 0
  %923 = vmatpush1.bf16.msra.mxu0 0
  %924 = vmatprep.subr.bf16.mxu0 0
  %925 = vmatpush1.bf16.msra.mxu0 0
  %926 = vmatprep.mubr.bf16.mxu0 %v851
  %927 = vmatmul.mubr.bf16.gmra.mrb[0].mxu0 %v330
  %v928 = vpop.f32.mrb[0].mxu0
  %v929 = vadd.f32 %v888, %v928
  %v930 = vpop.f32.mrb[0].mxu0
  %v931 = vadd.f32 %v890, %v930
  %v932 = vpop.f32.mrb[0].mxu0
  %v933 = vpop.f32.mrb[0].mxu0
  %934 = vdwg.mxu0
  %935 = vmatprep.subr.bf16.mxu0 0
  %936 = vmatpush1.bf16.msra.mxu0 %v701
  %937 = vmatprep.subr.bf16.mxu0 0
  %938 = vmatpush1.bf16.msra.mxu0 %v704
  %939 = vmatprep.subr.bf16.mxu0 0
  %940 = vmatpush1.bf16.msra.mxu0 %v707
  %941 = vmatprep.subr.bf16.mxu0 0
  %942 = vmatpush1.bf16.msra.mxu0 %v710
  %943 = vmatprep.subr.bf16.mxu0 0
  %944 = vmatpush1.bf16.msra.mxu0 %v713
  %945 = vmatprep.subr.bf16.mxu0 0
  %946 = vmatpush1.bf16.msra.mxu0 %v716
  %947 = vmatprep.subr.bf16.mxu0 0
  %948 = vmatpush1.bf16.msra.mxu0 %v719
  %949 = vmatprep.subr.bf16.mxu0 0
  %950 = vmatpush1.bf16.msra.mxu0 %v722
  %951 = vmatprep.subr.bf16.mxu0 0
  %952 = vmatpush1.bf16.msra.mxu0 %v725
  %953 = vmatprep.subr.bf16.mxu0 0
  %954 = vmatpush1.bf16.msra.mxu0 %v728
  %955 = vmatprep.subr.bf16.mxu0 0
  %956 = vmatpush1.bf16.msra.mxu0 %v731
  %957 = vmatprep.subr.bf16.mxu0 0
  %958 = vmatpush1.bf16.msra.mxu0 %v734
  %959 = vmatprep.subr.bf16.mxu0 0
  %960 = vmatpush1.bf16.msra.mxu0 %v737
  %961 = vmatprep.subr.bf16.mxu0 0
  %962 = vmatpush1.bf16.msra.mxu0 %v740
  %963 = vmatprep.subr.bf16.mxu0 0
  %964 = vmatpush1.bf16.msra.mxu0 %v743
  %965 = vmatprep.subr.bf16.mxu0 0
  %966 = vmatpush1.bf16.msra.mxu0 %v746
  %967 = vmatprep.mubr.bf16.mxu0 %v329
  %968 = vmatmul.mubr.bf16.gmra.mrb[0].mxu0 %v328
  %v969 = vpop.f32.mrb[0].mxu0
  %v970 = vadd.f32 %v445, %v969
  %v971 = vpop.f32.mrb[0].mxu0
  %v972 = vpop.f32.mrb[0].mxu0
  %v973 = vpop.f32.mrb[0].mxu0
  %974 = vdwg.mxu0
  %975 = vmatprep.subr.bf16.mxu0 0
  %976 = vmatpush1.bf16.msra.mxu0 %v749
  %977 = vmatprep.subr.bf16.mxu0 0
  %978 = vmatpush1.bf16.msra.mxu0 %v752
  %979 = vmatprep.subr.bf16.mxu0 0
  %980 = vmatpush1.bf16.msra.mxu0 %v755
  %981 = vmatprep.subr.bf16.mxu0 0
  %982 = vmatpush1.bf16.msra.mxu0 %v758
  %983 = vmatprep.subr.bf16.mxu0 0
  %984 = vmatpush1.bf16.msra.mxu0 %v761
  %985 = vmatprep.subr.bf16.mxu0 0
  %986 = vmatpush1.bf16.msra.mxu0 %v764
  %987 = vmatprep.subr.bf16.mxu0 0
  %988 = vmatpush1.bf16.msra.mxu0 %v767
  %989 = vmatprep.subr.bf16.mxu0 0
  %990 = vmatpush1.bf16.msra.mxu0 %v770
  %991 = vmatprep.subr.bf16.mxu0 0
  %992 = vmatpush1.bf16.msra.mxu0 %v773
  %993 = vmatprep.subr.bf16.mxu0 0
  %994 = vmatpush1.bf16.msra.mxu0 0
  %995 = vmatprep.subr.bf16.mxu0 0
  %996 = vmatpush1.bf16.msra.mxu0 0
  %997 = vmatprep.subr.bf16.mxu0 0
  %998 = vmatpush1.bf16.msra.mxu0 0
  %999 = vmatprep.subr.bf16.mxu0 0
  %1000 = vmatpush1.bf16.msra.mxu0 0
  %1001 = vmatprep.subr.bf16.mxu0 0
  %1002 = vmatpush1.bf16.msra.mxu0 0
  %1003 = vmatprep.subr.bf16.mxu0 0
  %1004 = vmatpush1.bf16.msra.mxu0 0
  %1005 = vmatprep.subr.bf16.mxu0 0
  %1006 = vmatpush1.bf16.msra.mxu0 0
  %1007 = vmatprep.mubr.bf16.mxu0 %v851
  %1008 = vmatmul.mubr.bf16.gmra.mrb[0].mxu0 %v330
  %v1009 = vpop.f32.mrb[0].mxu0
  %v1010 = vadd.f32 %v970, %v1009
  %v1011 = vpop.f32.mrb[0].mxu0
  %v1012 = vpop.f32.mrb[0].mxu0
  %v1013 = vpop.f32.mrb[0].mxu0
  %1014 = vdwg.mxu0
  %v1015 = vmax.f32 %v929, 0.0
  %v1016 = vmax.f32 %v931, 0.0
  %v1017 = vmax.f32 %v1010, 0.0
  %v1018 = vpack.c.bf16 %v1015, %v1015
  %v1019 = vpack.c.bf16 %v1016, %v1016
  %v1020 = vpack.c.bf16 %v1017, %v1017
  %v1021 = vld [vmem:[%s5] sm:$0xf]
  %v1022 = vld [vmem:[%s5 + $0x4] sm:$0xf]
  %v1023 = vld [vmem:[%s5 + $0x8] sm:$0xf]
  %v1024 = vld [vmem:[%s5 + $0xc] sm:$0xf]
  %v1025 = vld [vmem:[%s5 + $0x10] sm:$0xf]
  %v1026 = vld [vmem:[%s5 + $0x14] sm:$0xf]
  %v1027 = vld [vmem:[%s5 + $0x18] sm:$0xf]
  %v1028 = vld [vmem:[%s5 + $0x1c] sm:$0xf]
  %v1029 = vld [vmem:[%s5 + $0x20] sm:$0xf]
  %v1030 = vld [vmem:[%s5 + $0x24] sm:$0xf]
  %v1031 = vld [vmem:[%s5 + $0x28] sm:$0xf]
  %v1032 = vld [vmem:[%s5 + $0x2c] sm:$0xf]
  %v1033 = vld [vmem:[%s5 + $0x30] sm:$0xf]
  %v1034 = vld [vmem:[%s5 + $0x34] sm:$0xf]
  %v1035 = vld [vmem:[%s5 + $0x38] sm:$0xf]
  %v1036 = vld [vmem:[%s5 + $0x3c] sm:$0xf]
  %v1037 = vld [vmem:[%s5 + $0x40] sm:$0xf]
  %v1038 = vld [vmem:[%s5 + $0x44] sm:$0xf]
  %v1039 = vld [vmem:[%s5 + $0x48] sm:$0xf]
  %v1040 = vld [vmem:[%s5 + $0x4c] sm:$0xf]
  %v1041 = vld [vmem:[%s5 + $0x50] sm:$0xf]
  %v1042 = vld [vmem:[%s5 + $0x54] sm:$0xf]
  %v1043 = vld [vmem:[%s5 + $0x58] sm:$0xf]
  %v1044 = vld [vmem:[%s5 + $0x5c] sm:$0xf]
  %v1045 = vld [vmem:[%s5 + $0x60] sm:$0xf]
  %v1046 = vld [vmem:[%s5 + $0x64] sm:$0xf]
  %v1047 = vld [vmem:[%s5 + $0x68] sm:$0xf]
  %v1048 = vld [vmem:[%s5 + $0x6c] sm:$0xf]
  %v1049 = vld [vmem:[%s5 + $0x70] sm:$0xf]
  %v1050 = vld [vmem:[%s5 + $0x74] sm:$0xf]
  %v1051 = vld [vmem:[%s5 + $0x78] sm:$0xf]
  %v1052 = vld [vmem:[%s5 + $0x7c] sm:$0xf]
  %v1053 = vld [vmem:[%s5 + $0x80] sm:$0xf]
  %v1054 = vld [vmem:[%s5 + $0x84] sm:$0xf]
  %v1055 = vld [vmem:[%s5 + $0x88] sm:$0xf]
  %v1056 = vld [vmem:[%s5 + $0x8c] sm:$0xf]
  %v1057 = vld [vmem:[%s5 + $0x90] sm:$0xf]
  %v1058 = vld [vmem:[%s5 + $0x94] sm:$0xf]
  %v1059 = vld [vmem:[%s6] sm:$0x1]
  %v1061 = vlaneseq
  %v1062 = vshrl.u32 %v1061, 7
  %v1063 = vsub.s32 0, %v1062
  %v1064 = vrot.slane %v1059, %v1063
  %v1104 = vunpack.c.l.b16 %v1021
  %v1105 = vunpack.c.l.b16 %v1022
  %v1106 = vunpack.c.l.b16 %v1023
  %v1107 = vunpack.c.l.b16 %v1024
  %v1108 = vunpack.c.l.b16 %v1025
  %v1109 = vunpack.c.l.b16 %v1026
  %v1110 = vunpack.c.l.b16 %v1027
  %v1111 = vunpack.c.l.b16 %v1028
  %v1112 = vunpack.c.l.b16 %v1029
  %v1113 = vunpack.c.l.b16 %v1030
  %v1114 = vunpack.c.l.b16 %v1031
  %v1115 = vunpack.c.l.b16 %v1032
  %v1116 = vunpack.c.l.b16 %v1033
  %v1117 = vunpack.c.l.b16 %v1034
  %v1118 = vunpack.c.l.b16 %v1035
  %v1119 = vunpack.c.l.b16 %v1036
  %v1120 = vunpack.c.l.b16 %v1037
  %v1121 = vunpack.c.l.b16 %v1038
  %v1122 = vunpack.c.l.b16 %v1039
  %v1123 = vunpack.c.l.b16 %v1040
  %v1124 = vunpack.c.l.b16 %v1041
  %v1125 = vunpack.c.l.b16 %v1042
  %v1126 = vunpack.c.l.b16 %v1043
  %v1127 = vunpack.c.l.b16 %v1044
  %v1128 = vunpack.c.l.b16 %v1045
  %v1129 = vunpack.c.l.b16 %v1046
  %v1130 = vunpack.c.l.b16 %v1047
  %v1131 = vunpack.c.l.b16 %v1048
  %v1132 = vunpack.c.l.b16 %v1049
  %v1133 = vunpack.c.l.b16 %v1050
  %v1134 = vunpack.c.l.b16 %v1051
  %v1135 = vunpack.c.l.b16 %v1052
  %v1136 = vunpack.c.l.b16 %v1053
  %v1137 = vunpack.c.l.b16 %v1054
  %v1138 = vunpack.c.l.b16 %v1055
  %v1139 = vunpack.c.l.b16 %v1056
  %v1140 = vunpack.c.l.b16 %v1057
  %v1141 = vunpack.c.l.b16 %v1058
  %v1142 = vpack.c.b16 %v1105, %v1104
  %v1143 = vpack.c.b16 %v1107, %v1106
  %v1144 = vpack.c.b16 %v1109, %v1108
  %v1145 = vpack.c.b16 %v1111, %v1110
  %v1146 = vpack.c.b16 %v1113, %v1112
  %v1147 = vpack.c.b16 %v1115, %v1114
  %v1148 = vpack.c.b16 %v1117, %v1116
  %v1149 = vpack.c.b16 %v1119, %v1118
  %v1150 = vpack.c.b16 %v1121, %v1120
  %v1151 = vpack.c.b16 %v1123, %v1122
  %v1152 = vpack.c.b16 %v1125, %v1124
  %v1153 = vpack.c.b16 %v1127, %v1126
  %v1154 = vpack.c.b16 %v1129, %v1128
  %v1155 = vpack.c.b16 %v1131, %v1130
  %v1156 = vpack.c.b16 %v1133, %v1132
  %v1157 = vpack.c.b16 %v1135, %v1134
  %v1158 = vpack.c.b16 %v1137, %v1136
  %v1159 = vpack.c.b16 %v1139, %v1138
  %v1160 = vpack.c.b16 %v1141, %v1140
  %vm1180 = vcmask 392192
  %v1182 = vsel %vm1180, %v1020, 0
  %1184 = vmatprep.subr.bf16.mxu0 0
  %1185 = vmatpush1.bf16.msra.mxu0 %v1142
  %1186 = vmatprep.subr.bf16.mxu0 0
  %1187 = vmatpush1.bf16.msra.mxu0 %v1143
  %1188 = vmatprep.subr.bf16.mxu0 0
  %1189 = vmatpush1.bf16.msra.mxu0 %v1144
  %1190 = vmatprep.subr.bf16.mxu0 0
  %1191 = vmatpush1.bf16.msra.mxu0 %v1145
  %1192 = vmatprep.subr.bf16.mxu0 0
  %1193 = vmatpush1.bf16.msra.mxu0 %v1146
  %1194 = vmatprep.subr.bf16.mxu0 0
  %1195 = vmatpush1.bf16.msra.mxu0 %v1147
  %1196 = vmatprep.subr.bf16.mxu0 0
  %1197 = vmatpush1.bf16.msra.mxu0 %v1148
  %1198 = vmatprep.subr.bf16.mxu0 0
  %1199 = vmatpush1.bf16.msra.mxu0 %v1149
  %1200 = vmatprep.subr.bf16.mxu0 0
  %1201 = vmatpush1.bf16.msra.mxu0 %v1150
  %1202 = vmatprep.subr.bf16.mxu0 0
  %1203 = vmatpush1.bf16.msra.mxu0 %v1151
  %1204 = vmatprep.subr.bf16.mxu0 0
  %1205 = vmatpush1.bf16.msra.mxu0 %v1152
  %1206 = vmatprep.subr.bf16.mxu0 0
  %1207 = vmatpush1.bf16.msra.mxu0 %v1153
  %1208 = vmatprep.subr.bf16.mxu0 0
  %1209 = vmatpush1.bf16.msra.mxu0 %v1154
  %1210 = vmatprep.subr.bf16.mxu0 0
  %1211 = vmatpush1.bf16.msra.mxu0 %v1155
  %1212 = vmatprep.subr.bf16.mxu0 0
  %1213 = vmatpush1.bf16.msra.mxu0 %v1156
  %1214 = vmatprep.subr.bf16.mxu0 0
  %1215 = vmatpush1.bf16.msra.mxu0 %v1157
  %1216 = vmatprep.mubr.bf16.mxu0 %v1019
  %1217 = vmatmul.mubr.bf16.gmra.mrb[0].mxu0 %v1018
  %v1218 = vpop.f32.mrb[0].mxu0
  %v1219 = vadd.f32 %v1064, %v1218
  %v1220 = vpop.f32.mrb[0].mxu0
  %v1221 = vpop.f32.mrb[0].mxu0
  %v1222 = vpop.f32.mrb[0].mxu0
  %1223 = vdwg.mxu0
  %1224 = vmatprep.subr.bf16.mxu0 0
  %1225 = vmatpush1.bf16.msra.mxu0 %v1158
  %1226 = vmatprep.subr.bf16.mxu0 0
  %1227 = vmatpush1.bf16.msra.mxu0 %v1159
  %1228 = vmatprep.subr.bf16.mxu0 0
  %1229 = vmatpush1.bf16.msra.mxu0 %v1160
  %1230 = vmatprep.subr.bf16.mxu0 0
  %1231 = vmatpush1.bf16.msra.mxu0 0
  %1232 = vmatprep.subr.bf16.mxu0 0
  %1233 = vmatpush1.bf16.msra.mxu0 0
  %1234 = vmatprep.subr.bf16.mxu0 0
  %1235 = vmatpush1.bf16.msra.mxu0 0
  %1236 = vmatprep.subr.bf16.mxu0 0
  %1237 = vmatpush1.bf16.msra.mxu0 0
  %1238 = vmatprep.subr.bf16.mxu0 0
  %1239 = vmatpush1.bf16.msra.mxu0 0
  %1240 = vmatprep.subr.bf16.mxu0 0
  %1241 = vmatpush1.bf16.msra.mxu0 0
  %1242 = vmatprep.subr.bf16.mxu0 0
  %1243 = vmatpush1.bf16.msra.mxu0 0
  %1244 = vmatprep.subr.bf16.mxu0 0
  %1245 = vmatpush1.bf16.msra.mxu0 0
  %1246 = vmatprep.subr.bf16.mxu0 0
  %1247 = vmatpush1.bf16.msra.mxu0 0
  %1248 = vmatprep.subr.bf16.mxu0 0
  %1249 = vmatpush1.bf16.msra.mxu0 0
  %1250 = vmatprep.subr.bf16.mxu0 0
  %1251 = vmatpush1.bf16.msra.mxu0 0
  %1252 = vmatprep.subr.bf16.mxu0 0
  %1253 = vmatpush1.bf16.msra.mxu0 0
  %1254 = vmatprep.subr.bf16.mxu0 0
  %1255 = vmatpush1.bf16.msra.mxu0 0
  %1256 = vmatprep.mubr.bf16.mxu0 0
  %1257 = vmatmul.mubr.bf16.gmra.mrb[0].mxu0 %v1182
  %v1258 = vpop.f32.mrb[0].mxu0
  %v1259 = vadd.f32 %v1219, %v1258
  %v1260 = vpop.f32.mrb[0].mxu0
  %v1261 = vpop.f32.mrb[0].mxu0
  %v1262 = vpop.f32.mrb[0].mxu0
  %1263 = vdwg.mxu0
  %vm1264 = vcmask 64512
  %1265 = vst.msk [vmem:[%s7] sm:$0xff] %vm1264, %v1259
  // Predicated region
  $region30: #{critic_forward.1} parent=0 // pred_check
    _
  $region31: #{critic_forward.1} parent=0 // pred_check_branch
    %1267 = sbr.rel (0) target = $region33
  $region32: #{critic_forward.1} parent=0 // pred_region
    _
  $region33: #{critic_forward.1} parent=0 // pred_fallthru
    _
  // Predicated region
  $region34: #{critic_forward.1} parent=0 // pred_check
    _
  $region35: #{critic_forward.1} parent=0 // pred_check_branch
    %1269 = sbr.rel (0) target = $region37
  $region36: #{critic_forward.1} parent=0 // pred_region
    _
  $region37: #{critic_forward.1} parent=0 // pred_fallthru
    _

</llo_original>
